<compile_context>
chip_gen: v6e
topology: v6e:2x2x1
jax: 0.10.0
libtpu: 0.0.40
codegen_flags: <defaults>
</compile_context>

<pallas_src>
import jax
import jax.numpy as jnp
from jax.experimental import pallas as pl
from jax.experimental.pallas import tpu as pltpu


def decoder_kernel(z_ref, w2_ref, b2_ref, w3_ref, b3_ref, o_ref):
    # h = tanh(z @ W2 + b2)   (TB, L) @ (L, H) -> (TB, H); f32 (K=32, cheap).
    h = jnp.tanh(
        jnp.dot(z_ref[...], w2_ref[...], preferred_element_type=jnp.float32)
        + b2_ref[...]
    )
    # out = h @ W3 + b3       (TB, H) @ (H, F) -> (TB, F); bf16 MXU, f32 acc.
    o_ref[...] = (
        jnp.dot(h.astype(jnp.bfloat16), w3_ref[...],
                preferred_element_type=jnp.float32)
        + b3_ref[...]
    ).astype(o_ref.dtype)


def _round_up(x, m):
    return ((x + m - 1) // m) * m


def prepare_decoder_params(w2, b2, w3, b3):
    """One-time parameter prep. Call once; reuse the result across decoder
    calls so casts don't become per-call XLA launches.

    w2: (L, H) f32, b2: (H,) or (1, H), w3: (H, F), b3: (F,) or (1, F).
    """
    return (
        w2.astype(jnp.float32),                     # f32 for the first GEMM
        b2.reshape(1, -1).astype(jnp.float32),
        w3.astype(jnp.bfloat16),                    # bf16 MXU operand
        b3.reshape(1, -1).astype(jnp.float32),
    )


def _choose_tb(B, tb_max):
    if B <= 256:
        # Small batch: one tile (grid=1 is unavoidable here).
        return _round_up(B, 8)
    # Large batch: keep each tile >=256 rows (fills the 256-wide MXU M dim on
    # v6e/v7x) but split into >=2 grid steps so the "parallel" batch axis can
    # shard across v7x's two TensorCores. Harmless on v5e/v6e.
    half = _round_up((B + 1) // 2, 16)
    return min(tb_max, max(256, half))


def simple_decoder(z, prepared_params, *, tb_max=512):
    """z: (B, L) f32; prepared_params from prepare_decoder_params()."""
    w2, b2, w3, b3 = prepared_params
    B, L = z.shape
    H = w2.shape[1]
    F_out = w3.shape[1]

    TB = _choose_tb(B, tb_max)
    B_pad = _round_up(B, TB)

    zp = z if B_pad == B else jnp.pad(z, ((0, B_pad - B), (0, 0)))

    grid = (B_pad // TB,)

    cost = pl.CostEstimate(
        flops=2 * B_pad * (L * H + H * F_out),
        transcendentals=B_pad * H,
        bytes_accessed=(zp.size * 4 + w2.size * 4 + b2.size * 4
                        + w3.size * 2 + b3.size * 4 + B_pad * F_out * 4),
    )

    out = pl.pallas_call(
        decoder_kernel,
        out_shape=jax.ShapeDtypeStruct((B_pad, F_out), jnp.float32),
        grid=grid,
        in_specs=[
            pl.BlockSpec((TB, L), lambda i: (i, 0),
                         memory_space=pltpu.MemorySpace.VMEM),
            pl.BlockSpec((L, H), lambda i: (0, 0),
                         memory_space=pltpu.MemorySpace.VMEM),
            pl.BlockSpec((1, H), lambda i: (0, 0),
                         memory_space=pltpu.MemorySpace.VMEM),
            pl.BlockSpec((H, F_out), lambda i: (0, 0),
                         memory_space=pltpu.MemorySpace.VMEM),
            pl.BlockSpec((1, F_out), lambda i: (0, 0),
                         memory_space=pltpu.MemorySpace.VMEM),
        ],
        out_specs=pl.BlockSpec((TB, F_out), lambda i: (i, 0),
                               memory_space=pltpu.MemorySpace.VMEM),
        compiler_params=pltpu.CompilerParams(
            dimension_semantics=("parallel",),
        ),
        cost_estimate=cost,
    )(zp, w2, b2, w3, b3)

    return out if B_pad == B else out[:B]


def init_params(key, F=513, H=128, L=32):
    """Deterministic synthetic params mimicking nn.Linear shapes.

    PyTorch stores Linear weight as (out, in); we store the transpose
    (in, out) so the kernel can do z @ W directly.
    """
    k1, k2, k3, k4 = jax.random.split(key, 4)
    bound2 = 1.0 / jnp.sqrt(L)
    bound3 = 1.0 / jnp.sqrt(H)
    w2 = jax.random.uniform(k1, (L, H), jnp.float32, -bound2, bound2)
    b2 = jax.random.uniform(k2, (1, H), jnp.float32, -bound2, bound2)
    w3 = jax.random.uniform(k3, (H, F), jnp.float32, -bound3, bound3)
    b3 = jax.random.uniform(k4, (1, F), jnp.float32, -bound3, bound3)
    return w2, b2, w3, b3


def reference(z, w2, b2, w3, b3):
    h = jnp.tanh(z @ w2 + b2)
    return h @ w3 + b3


if __name__ == "__main__":
    F_dim, H_dim, L_dim = 513, 128, 32
    B = 8

    key = jax.random.PRNGKey(0)
    kz, kp = jax.random.split(key)
    z = jax.random.normal(kz, (B, L_dim), jnp.float32)
    w2, b2, w3, b3 = init_params(kp, F=F_dim, H=H_dim, L=L_dim)

    # One-time parameter prep, reused across all decoder calls.
    params = prepare_decoder_params(w2, b2, w3, b3)
    params = jax.block_until_ready(params)

    out = simple_decoder(z, params)
    out = jax.block_until_ready(out)

    ref = reference(z, w2, b2, w3, b3)
    assert out.shape == (B, F_dim), out.shape
    # First GEMM f32, second GEMM bf16 operands with f32 accumulation.
    assert jnp.allclose(out, ref, atol=2e-2, rtol=2e-2), float(
        jnp.max(jnp.abs(out - ref))
    )
    print("KERNEL_OK")
</pallas_src>

<mosaic_0001>
module attributes {stable_mosaic.version = 11 : i64} {
  func.func @decoder_kernel(%arg0: i32, %arg1: memref<8x32xf32, #tpu.memory_space<vmem>>, %arg2: memref<32x128xf32, #tpu.memory_space<vmem>>, %arg3: memref<1x128xf32, #tpu.memory_space<vmem>>, %arg4: memref<128x513xbf16, #tpu.memory_space<vmem>>, %arg5: memref<1x513xf32, #tpu.memory_space<vmem>>, %arg6: memref<8x513xf32, #tpu.memory_space<vmem>>) attributes {dimension_semantics = [#tpu.dimension_semantics<parallel>], iteration_bounds = array<i64: 1>, scalar_prefetch = 0 : i64, scratch_operands = 0 : i64, tpu.core_type = #tpu.core_type<tc>, window_params = [{transform_indices = @transform_0, window_bounds = array<i64: 8, 32>}, {pipeline_mode = #tpu.pipeline_mode<synchronous>, transform_indices = @transform_1, window_bounds = array<i64: 32, 128>}, {pipeline_mode = #tpu.pipeline_mode<synchronous>, transform_indices = @transform_2, window_bounds = array<i64: 1, 128>}, {pipeline_mode = #tpu.pipeline_mode<synchronous>, transform_indices = @transform_3, window_bounds = array<i64: 128, 513>}, {pipeline_mode = #tpu.pipeline_mode<synchronous>, transform_indices = @transform_4, window_bounds = array<i64: 1, 513>}, {transform_indices = @transform_5, window_bounds = array<i64: 8, 513>}]} {
    %c0 = arith.constant 0 : index
    %c0_0 = arith.constant 0 : index
    %0 = vector.load %arg1[%c0, %c0_0] : memref<8x32xf32, #tpu.memory_space<vmem>>, vector<8x32xf32>
    %c0_1 = arith.constant 0 : index
    %c0_2 = arith.constant 0 : index
    %1 = vector.load %arg2[%c0_1, %c0_2] : memref<32x128xf32, #tpu.memory_space<vmem>>, vector<32x128xf32>
    %cst = arith.constant dense<0.000000e+00> : vector<8x128xf32>
    %2 = tpu.matmul %0, %1, %cst {dimension_numbers = #tpu.dot_dimension_numbers<[1], [0], [0], [1], [0, 0, 1, 1], [], []>} : vector<8x32xf32>, vector<32x128xf32>, vector<8x128xf32> -> vector<8x128xf32>
    %c0_3 = arith.constant 0 : index
    %c0_4 = arith.constant 0 : index
    %3 = vector.load %arg3[%c0_3, %c0_4] : memref<1x128xf32, #tpu.memory_space<vmem>>, vector<1x128xf32>
    %4 = vector.broadcast %3 : vector<1x128xf32> to vector<8x128xf32>
    %5 = arith.addf %2, %4 : vector<8x128xf32>
    %6 = math.tanh %5 : vector<8x128xf32>
    %7 = arith.truncf %6 : vector<8x128xf32> to vector<8x128xbf16>
    %c0_5 = arith.constant 0 : index
    %c0_6 = arith.constant 0 : index
    %8 = vector.load %arg4[%c0_5, %c0_6] : memref<128x513xbf16, #tpu.memory_space<vmem>>, vector<128x513xbf16>
    %cst_7 = arith.constant dense<0.000000e+00> : vector<8x513xf32>
    %9 = tpu.matmul %7, %8, %cst_7 {dimension_numbers = #tpu.dot_dimension_numbers<[1], [0], [0], [1], [0, 0, 1, 1], [], []>} : vector<8x128xbf16>, vector<128x513xbf16>, vector<8x513xf32> -> vector<8x513xf32>
    %c0_8 = arith.constant 0 : index
    %c0_9 = arith.constant 0 : index
    %10 = vector.load %arg5[%c0_8, %c0_9] : memref<1x513xf32, #tpu.memory_space<vmem>>, vector<1x513xf32>
    %11 = vector.broadcast %10 : vector<1x513xf32> to vector<8x513xf32>
    %12 = arith.addf %9, %11 : vector<8x513xf32>
    %c0_10 = arith.constant 0 : index
    %c0_11 = arith.constant 0 : index
    %13 = vector.load %arg6[%c0_10, %c0_11] : memref<8x513xf32, #tpu.memory_space<vmem>>, vector<8x513xf32>
    tpu.vector_store %arg6[%c0_10, %c0_11], %12 {strides = array<i32>} : memref<8x513xf32, #tpu.memory_space<vmem>>, vector<8x513xf32>,
    return
  }
  func.func @transform_0(%arg0: i32) -> (i32, i32) {
    %c0_i32 = arith.constant 0 : i32
    %c0_i32_0 = arith.constant 0 : i32
    return %arg0, %c0_i32 : i32, i32
  }
  func.func @transform_1(%arg0: i32) -> (i32, i32) {
    %c0_i32 = arith.constant 0 : i32
    %c0_i32_0 = arith.constant 0 : i32
    %c0_i32_1 = arith.constant 0 : i32
    return %c0_i32, %c0_i32_0 : i32, i32
  }
  func.func @transform_2(%arg0: i32) -> (i32, i32) {
    %c0_i32 = arith.constant 0 : i32
    %c0_i32_0 = arith.constant 0 : i32
    %c0_i32_1 = arith.constant 0 : i32
    return %c0_i32, %c0_i32_0 : i32, i32
  }
  func.func @transform_3(%arg0: i32) -> (i32, i32) {
    %c0_i32 = arith.constant 0 : i32
    %c0_i32_0 = arith.constant 0 : i32
    %c0_i32_1 = arith.constant 0 : i32
    return %c0_i32, %c0_i32_0 : i32, i32
  }
  func.func @transform_4(%arg0: i32) -> (i32, i32) {
    %c0_i32 = arith.constant 0 : i32
    %c0_i32_0 = arith.constant 0 : i32
    %c0_i32_1 = arith.constant 0 : i32
    return %c0_i32, %c0_i32_0 : i32, i32
  }
  func.func @transform_5(%arg0: i32) -> (i32, i32) {
    %c0_i32 = arith.constant 0 : i32
    %c0_i32_0 = arith.constant 0 : i32
    return %arg0, %c0_i32 : i32, i32
  }
}

</mosaic_0001>

<llo_original>
// kernel: tpu_custom_call.1
$region0: #{tpu_custom_call.1}
  #allocation0 [shape = 'u32[]', space=smem, size = 0x4, offset = 0x4, fixed_abs, tag = 'smem constant byte address 0x4 - core index']
  #allocation1 [shape = 'u32[144,128]{1,0:T(1,128)}', space=vmem, size = 0x12000, scoped, tag = 'internal scratch']
  %s0 = inlined_call_operand.vmem [shape: f32[8,32], index: 0, kind: input, shape index: {}]
  %s1 = inlined_call_operand.vmem [shape: f32[32,128], index: 1, kind: input, shape index: {}]
  %s2 = inlined_call_operand.vmem [shape: f32[1,128], index: 2, kind: input, shape index: {}]
  %s3 = inlined_call_operand.vmem [shape: bf16[128,513], index: 3, kind: input, shape index: {}]
  %s4 = inlined_call_operand.vmem [shape: f32[1,513], index: 4, kind: input, shape index: {}]
  %s5 = inlined_call_operand.hbm [shape: f32[8,513], index: 5, kind: output, shape index: {}]
  %s6 = sld [smem:[#allocation0]]
  $region30: #{tpu_custom_call.1} parent=0
    _
  %s8 = ssub.s32 1, %s6
  %s9 = scalar_select 0, %s8, %s6
  $region1: #{tpu_custom_call.1} parent=0
    #allocation2 [shape = 'u8[20480]{0}', space=vmem, size = 0x5000, scoped, tag = 'output window, operand 0, single buffered']
    #allocation3 [shape = 's32[1]{0}', space=sflag, size = 0x4, scoped, tag = 'scoped memory for tpu_custom_call.1']
    %10 = vsyncpa [#allocation3], 0
    // Predicated region
    $region2: #{tpu_custom_call.1} parent=1 // pred_check
      _
    $region3: #{tpu_custom_call.1} parent=1 // pred_check_branch
      %12 = sbr.rel (0) target = $region5
    $region4: #{tpu_custom_call.1} parent=1 // pred_region
      _
    $region5: #{tpu_custom_call.1} parent=1 // pred_fallthru
      _
    // Predicated region
    $region6: #{tpu_custom_call.1} parent=1 // pred_check
      _
    $region7: #{tpu_custom_call.1} parent=1 // pred_check_branch
      %14 = sbr.rel (0) target = $region9
    $region8: #{tpu_custom_call.1} parent=1 // pred_region
      _
    $region9: #{tpu_custom_call.1} parent=1 // pred_fallthru
      _
    // Predicated region
    $region10: #{tpu_custom_call.1} parent=1 // pred_check
      _
    $region11: #{tpu_custom_call.1} parent=1 // pred_check_branch
      %16 = sbr.rel (0) target = $region13
    $region12: #{tpu_custom_call.1} parent=1 // pred_region
      _
    $region13: #{tpu_custom_call.1} parent=1 // pred_fallthru
      _
    // Predicated region
    $region14: #{tpu_custom_call.1} parent=1 // pred_check
      _
    $region15: #{tpu_custom_call.1} parent=1 // pred_check_branch
      %18 = sbr.rel (0) target = $region17
    $region16: #{tpu_custom_call.1} parent=1 // pred_region
      _
    $region17: #{tpu_custom_call.1} parent=1 // pred_fallthru
      _
    // Predicated region
    $region18: #{tpu_custom_call.1} parent=1 // pred_check
      _
    $region19: #{tpu_custom_call.1} parent=1 // pred_check_branch
      %20 = sbr.rel (0) target = $region21
    $region20: #{tpu_custom_call.1} parent=1 // pred_region
      _
    $region21: #{tpu_custom_call.1} parent=1 // pred_fallthru
      _
    %v22 = vld [vmem:[%s0] sm:$0xff]
    %v23 = vld [vmem:[%s1] sm:$0xff]
    %v24 = vld [vmem:[%s1 + $0x8] sm:$0xff]
    %v25 = vld [vmem:[%s1 + $0x10] sm:$0xff]
    %v26 = vld [vmem:[%s1 + $0x18] sm:$0xff]
    %v27 = vld [vmem:[%s2] sm:$0x1]
    %v29 = vlaneseq
    %v30 = vshrl.u32 %v29, 7
    %v31 = vsub.s32 0, %v30
    %v32 = vrot.slane %v27, %v31
    %vm34 = vcmask 261120
    %v36 = vsel %vm34, %v22, 0
    %38 = vmatprep.subr.mxu0 0.0
    %39 = vmatpush1.msra.mxu0 0.0
    %40 = vmatprep.subr.mxu0 0.0
    %41 = vmatpush1.msra.mxu0 0.0
    %42 = vmatprep.subr.mxu0 0.0
    %43 = vmatpush1.msra.mxu0 0.0
    %44 = vmatprep.subr.mxu0 0.0
    %45 = vmatpush1.msra.mxu0 0.0
    %46 = vmatprep.subr.mxu0 0.0
    %47 = vmatpush1.msra.mxu0 0.0
    %48 = vmatprep.subr.mxu0 0.0
    %49 = vmatpush1.msra.mxu0 0.0
    %50 = vmatprep.subr.mxu0 0.0
    %51 = vmatpush1.msra.mxu0 0.0
    %52 = vmatprep.subr.mxu0 0.0
    %53 = vmatpush1.msra.mxu0 0.0
    %54 = vmatprep.subr.mxu0 0.0
    %55 = vmatpush1.msra.mxu0 0.0
    %56 = vmatprep.subr.mxu0 0.0
    %57 = vmatpush1.msra.mxu0 0.0
    %58 = vmatprep.subr.mxu0 0.0
    %59 = vmatpush1.msra.mxu0 0.0
    %60 = vmatprep.subr.mxu0 0.0
    %61 = vmatpush1.msra.mxu0 0.0
    %62 = vmatprep.subr.mxu0 0.0
    %63 = vmatpush1.msra.mxu0 %v26
    %64 = vmatprep.subr.mxu0 0.0
    %65 = vmatpush1.msra.mxu0 %v25
    %66 = vmatprep.subr.mxu0 0.0
    %67 = vmatpush1.msra.mxu0 %v24
    %68 = vmatprep.subr.mxu0 0.0
    %69 = vmatpush1.msra.mxu0 %v23
    %70 = vmatprep.subr.mxu0 0.0
    %71 = vmatpush2.msra.mxu0 0.0
    %72 = vmatprep.subr.mxu0 0.0
    %73 = vmatpush2.msra.mxu0 0.0
    %74 = vmatprep.subr.mxu0 0.0
    %75 = vmatpush2.msra.mxu0 0.0
    %76 = vmatprep.subr.mxu0 0.0
    %77 = vmatpush2.msra.mxu0 0.0
    %78 = vmatprep.subr.mxu0 0.0
    %79 = vmatpush2.msra.mxu0 0.0
    %80 = vmatprep.subr.mxu0 0.0
    %81 = vmatpush2.msra.mxu0 0.0
    %82 = vmatprep.subr.mxu0 0.0
    %83 = vmatpush2.msra.mxu0 0.0
    %84 = vmatprep.subr.mxu0 0.0
    %85 = vmatpush2.msra.mxu0 0.0
    %86 = vmatprep.subr.mxu0 0.0
    %87 = vmatpush2.msra.mxu0 0.0
    %88 = vmatprep.subr.mxu0 0.0
    %89 = vmatpush2.msra.mxu0 0.0
    %90 = vmatprep.subr.mxu0 0.0
    %91 = vmatpush2.msra.mxu0 0.0
    %92 = vmatprep.subr.mxu0 0.0
    %93 = vmatpush2.msra.mxu0 0.0
    %94 = vmatprep.subr.mxu0 0.0
    %95 = vmatpush2.msra.mxu0 0.0
    %96 = vmatprep.subr.mxu0 0.0
    %97 = vmatpush2.msra.mxu0 0.0
    %98 = vmatprep.subr.mxu0 0.0
    %99 = vmatpush2.msra.mxu0 0.0
    %100 = vmatprep.subr.mxu0 0.0
    %101 = vmatpush2.msra.mxu0 0.0
    %102 = vmatprep.mubr.f32.mxu0 0.0
    %103 = vmatmul.mubr.f32.gmra.mxu0 %v36
    %v104 = vpop.f32.mrf.mxu0
    %v105 = vadd.f32 %v32, %v104
    %v106 = vpop.f32.mrf.mxu0
    %107 = vdwg.mxu0
    %v108 = vtanh.pop %v105
    %v109 = vpack.c.bf16 %v108, %v108
    %v110 = vld [vmem:[%s3] sm:$0xff]
    %v111 = vld [vmem:[%s3 + $0x8] sm:$0xff]
    %v112 = vld [vmem:[%s3 + $0x10] sm:$0xf]
    %v113 = vld [vmem:[%s3 + $0x14] sm:$0xff]
    %v114 = vld [vmem:[%s3 + $0x1c] sm:$0xff]
    %v115 = vld [vmem:[%s3 + $0x24] sm:$0xf]
    %v116 = vld [vmem:[%s3 + $0x28] sm:$0xff]
    %v117 = vld [vmem:[%s3 + $0x30] sm:$0xff]
    %v118 = vld [vmem:[%s3 + $0x38] sm:$0xf]
    %v119 = vld [vmem:[%s3 + $0x3c] sm:$0xff]
    %v120 = vld [vmem:[%s3 + $0x44] sm:$0xff]
    %v121 = vld [vmem:[%s3 + $0x4c] sm:$0xf]
    %v122 = vld [vmem:[%s3 + $0x50] sm:$0xff]
    %v123 = vld [vmem:[%s3 + $0x58] sm:$0xff]
    %v124 = vld [vmem:[%s3 + $0x60] sm:$0xf]
    %v125 = vld [vmem:[%s3 + $0x64] sm:$0xff]
    %v126 = vld [vmem:[%s3 + $0x6c] sm:$0xff]
    %v127 = vld [vmem:[%s3 + $0x74] sm:$0xf]
    %v128 = vld [vmem:[%s3 + $0x78] sm:$0xff]
    %v129 = vld [vmem:[%s3 + $0x80] sm:$0xff]
    %v130 = vld [vmem:[%s3 + $0x88] sm:$0xf]
    %v131 = vld [vmem:[%s3 + $0x8c] sm:$0xff]
    %v132 = vld [vmem:[%s3 + $0x94] sm:$0xff]
    %v133 = vld [vmem:[%s3 + $0x9c] sm:$0xf]
    %v134 = vld [vmem:[%s3 + $0xa0] sm:$0xff]
    %v135 = vld [vmem:[%s3 + $0xa8] sm:$0xff]
    %v136 = vld [vmem:[%s3 + $0xb0] sm:$0xf]
    %v137 = vld [vmem:[%s3 + $0xb4] sm:$0xff]
    %v138 = vld [vmem:[%s3 + $0xbc] sm:$0xff]
    %v139 = vld [vmem:[%s3 + $0xc4] sm:$0xf]
    %v140 = vld [vmem:[%s3 + $0xc8] sm:$0xff]
    %v141 = vld [vmem:[%s3 + $0xd0] sm:$0xff]
    %v142 = vld [vmem:[%s3 + $0xd8] sm:$0xf]
    %v143 = vld [vmem:[%s3 + $0xdc] sm:$0xff]
    %v144 = vld [vmem:[%s3 + $0xe4] sm:$0xff]
    %v145 = vld [vmem:[%s3 + $0xec] sm:$0xf]
    %v146 = vld [vmem:[%s3 + $0xf0] sm:$0xff]
    %v147 = vld [vmem:[%s3 + $0xf8] sm:$0xff]
    %v148 = vld [vmem:[%s3 + $0x100] sm:$0xf]
    %v149 = vld [vmem:[%s3 + $0x104] sm:$0xff]
    %v150 = vld [vmem:[%s3 + $0x10c] sm:$0xff]
    %v151 = vld [vmem:[%s3 + $0x114] sm:$0xf]
    %v152 = vld [vmem:[%s3 + $0x118] sm:$0xff]
    %v153 = vld [vmem:[%s3 + $0x120] sm:$0xff]
    %v154 = vld [vmem:[%s3 + $0x128] sm:$0xf]
    %v155 = vld [vmem:[%s3 + $0x12c] sm:$0xff]
    %v156 = vld [vmem:[%s3 + $0x134] sm:$0xff]
    %v157 = vld [vmem:[%s3 + $0x13c] sm:$0xf]
    %v158 = vld [vmem:[%s4] sm:$0x1f]
    %v160 = vlaneseq
    %v161 = vshrl.u32 %v160, 7
    %v162 = vsub.s32 0, %v161
    %v163 = vrot.slane %v158, %v162
    %v164 = vlaneseq
    %v165 = vshrl.u32 %v164, 7
    %v166 = vsub.s32 1, %v165
    %v167 = vrot.slane %v158, %v166
    %v168 = vlaneseq
    %v169 = vshrl.u32 %v168, 7
    %v170 = vsub.s32 2, %v169
    %v171 = vrot.slane %v158, %v170
    %v172 = vlaneseq
    %v173 = vshrl.u32 %v172, 7
    %v174 = vsub.s32 3, %v173
    %v175 = vrot.slane %v158, %v174
    %v176 = vlaneseq
    %v177 = vshrl.u32 %v176, 7
    %v178 = vsub.s32 4, %v177
    %v179 = vrot.slane %v158, %v178
    %v233 = vunpack.c.l.b16 %v110
    %v234 = vunpack.c.h.b16 %v110
    %v235 = vunpack.c.l.b16 %v111
    %v236 = vunpack.c.h.b16 %v111
    %v237 = vunpack.c.l.b16 %v112
    %v238 = vunpack.c.l.b16 %v113
    %v239 = vunpack.c.h.b16 %v113
    %v240 = vunpack.c.l.b16 %v114
    %v241 = vunpack.c.h.b16 %v114
    %v242 = vunpack.c.l.b16 %v115
    %v243 = vunpack.c.l.b16 %v116
    %v244 = vunpack.c.h.b16 %v116
    %v245 = vunpack.c.l.b16 %v117
    %v246 = vunpack.c.h.b16 %v117
    %v247 = vunpack.c.l.b16 %v118
    %v248 = vunpack.c.l.b16 %v119
    %v249 = vunpack.c.h.b16 %v119
    %v250 = vunpack.c.l.b16 %v120
    %v251 = vunpack.c.h.b16 %v120
    %v252 = vunpack.c.l.b16 %v121
    %v253 = vunpack.c.l.b16 %v122
    %v254 = vunpack.c.h.b16 %v122
    %v255 = vunpack.c.l.b16 %v123
    %v256 = vunpack.c.h.b16 %v123
    %v257 = vunpack.c.l.b16 %v124
    %v258 = vunpack.c.l.b16 %v125
    %v259 = vunpack.c.h.b16 %v125
    %v260 = vunpack.c.l.b16 %v126
    %v261 = vunpack.c.h.b16 %v126
    %v262 = vunpack.c.l.b16 %v127
    %v263 = vunpack.c.l.b16 %v128
    %v264 = vunpack.c.h.b16 %v128
    %v265 = vunpack.c.l.b16 %v129
    %v266 = vunpack.c.h.b16 %v129
    %v267 = vunpack.c.l.b16 %v130
    %v268 = vunpack.c.l.b16 %v131
    %v269 = vunpack.c.h.b16 %v131
    %v270 = vunpack.c.l.b16 %v132
    %v271 = vunpack.c.h.b16 %v132
    %v272 = vunpack.c.l.b16 %v133
    %v273 = vunpack.c.l.b16 %v134
    %v274 = vunpack.c.h.b16 %v134
    %v275 = vunpack.c.l.b16 %v135
    %v276 = vunpack.c.h.b16 %v135
    %v277 = vunpack.c.l.b16 %v136
    %v278 = vunpack.c.l.b16 %v137
    %v279 = vunpack.c.h.b16 %v137
    %v280 = vunpack.c.l.b16 %v138
    %v281 = vunpack.c.h.b16 %v138
    %v282 = vunpack.c.l.b16 %v139
    %v283 = vunpack.c.l.b16 %v140
    %v284 = vunpack.c.h.b16 %v140
    %v285 = vunpack.c.l.b16 %v141
    %v286 = vunpack.c.h.b16 %v141
    %v287 = vunpack.c.l.b16 %v142
    %v288 = vunpack.c.l.b16 %v143
    %v289 = vunpack.c.h.b16 %v143
    %v290 = vunpack.c.l.b16 %v144
    %v291 = vunpack.c.h.b16 %v144
    %v292 = vunpack.c.l.b16 %v145
    %v293 = vunpack.c.l.b16 %v146
    %v294 = vunpack.c.h.b16 %v146
    %v295 = vunpack.c.l.b16 %v147
    %v296 = vunpack.c.h.b16 %v147
    %v297 = vunpack.c.l.b16 %v148
    %v298 = vunpack.c.l.b16 %v149
    %v299 = vunpack.c.h.b16 %v149
    %v300 = vunpack.c.l.b16 %v150
    %v301 = vunpack.c.h.b16 %v150
    %v302 = vunpack.c.l.b16 %v151
    %v303 = vunpack.c.l.b16 %v152
    %v304 = vunpack.c.h.b16 %v152
    %v305 = vunpack.c.l.b16 %v153
    %v306 = vunpack.c.h.b16 %v153
    %v307 = vunpack.c.l.b16 %v154
    %v308 = vunpack.c.l.b16 %v155
    %v309 = vunpack.c.h.b16 %v155
    %v310 = vunpack.c.l.b16 %v156
    %v311 = vunpack.c.h.b16 %v156
    %v312 = vunpack.c.l.b16 %v157
    %v313 = vpack.c.b16 %v238, %v233
    %v314 = vpack.c.b16 %v239, %v234
    %v315 = vpack.c.b16 %v240, %v235
    %v316 = vpack.c.b16 %v241, %v236
    %v317 = vpack.c.b16 %v242, %v237
    %v318 = vpack.c.b16 %v248, %v243
    %v319 = vpack.c.b16 %v249, %v244
    %v320 = vpack.c.b16 %v250, %v245
    %v321 = vpack.c.b16 %v251, %v246
    %v322 = vpack.c.b16 %v252, %v247
    %v323 = vpack.c.b16 %v258, %v253
    %v324 = vpack.c.b16 %v259, %v254
    %v325 = vpack.c.b16 %v260, %v255
    %v326 = vpack.c.b16 %v261, %v256
    %v327 = vpack.c.b16 %v262, %v257
    %v328 = vpack.c.b16 %v268, %v263
    %v329 = vpack.c.b16 %v269, %v264
    %v330 = vpack.c.b16 %v270, %v265
    %v331 = vpack.c.b16 %v271, %v266
    %v332 = vpack.c.b16 %v272, %v267
    %v333 = vpack.c.b16 %v278, %v273
    %v334 = vpack.c.b16 %v279, %v274
    %v335 = vpack.c.b16 %v280, %v275
    %v336 = vpack.c.b16 %v281, %v276
    %v337 = vpack.c.b16 %v282, %v277
    %v338 = vpack.c.b16 %v288, %v283
    %v339 = vpack.c.b16 %v289, %v284
    %v340 = vpack.c.b16 %v290, %v285
    %v341 = vpack.c.b16 %v291, %v286
    %v342 = vpack.c.b16 %v292, %v287
    %v343 = vpack.c.b16 %v298, %v293
    %v344 = vpack.c.b16 %v299, %v294
    %v345 = vpack.c.b16 %v300, %v295
    %v346 = vpack.c.b16 %v301, %v296
    %v347 = vpack.c.b16 %v302, %v297
    %v348 = vpack.c.b16 %v308, %v303
    %v349 = vpack.c.b16 %v309, %v304
    %v350 = vpack.c.b16 %v310, %v305
    %v351 = vpack.c.b16 %v311, %v306
    %v352 = vpack.c.b16 %v312, %v307
    %393 = vmatprep.subr.bf16.mxu0 %v349
    %394 = vmatpush1.bf16.msra.mxu0 %v348
    %395 = vmatprep.subr.bf16.mxu0 %v344
    %396 = vmatpush1.bf16.msra.mxu0 %v343
    %397 = vmatprep.subr.bf16.mxu0 %v339
    %398 = vmatpush1.bf16.msra.mxu0 %v338
    %399 = vmatprep.subr.bf16.mxu0 %v334
    %400 = vmatpush1.bf16.msra.mxu0 %v333
    %401 = vmatprep.subr.bf16.mxu0 %v329
    %402 = vmatpush1.bf16.msra.mxu0 %v328
    %403 = vmatprep.subr.bf16.mxu0 %v324
    %404 = vmatpush1.bf16.msra.mxu0 %v323
    %405 = vmatprep.subr.bf16.mxu0 %v319
    %406 = vmatpush1.bf16.msra.mxu0 %v318
    %407 = vmatprep.subr.bf16.mxu0 %v314
    %408 = vmatpush1.bf16.msra.mxu0 %v313
    %409 = vmatprep.subr.bf16.mxu0 0
    %410 = vmatpush2.bf16.msra.mxu0 0
    %411 = vmatprep.subr.bf16.mxu0 0
    %412 = vmatpush2.bf16.msra.mxu0 0
    %413 = vmatprep.subr.bf16.mxu0 0
    %414 = vmatpush2.bf16.msra.mxu0 0
    %415 = vmatprep.subr.bf16.mxu0 0
    %416 = vmatpush2.bf16.msra.mxu0 0
    %417 = vmatprep.subr.bf16.mxu0 0
    %418 = vmatpush2.bf16.msra.mxu0 0
    %419 = vmatprep.subr.bf16.mxu0 0
    %420 = vmatpush2.bf16.msra.mxu0 0
    %421 = vmatprep.subr.bf16.mxu0 0
    %422 = vmatpush2.bf16.msra.mxu0 0
    %423 = vmatprep.subr.bf16.mxu0 0
    %424 = vmatpush2.bf16.msra.mxu0 0
    %425 = vmatprep.mubr.bf16.mxu0 0
    %426 = vmatmul.mubr.bf16.gmra.mxu0 %v109
    %v427 = vpop.f32.mrf.mxu0
    %v428 = vadd.f32 %v163, %v427
    %v429 = vpop.f32.mrf.mxu0
    %v430 = vadd.f32 %v167, %v429
    %v431 = vpop.f32.mrf.mxu0
    %v432 = vpop.f32.mrf.mxu0
    %433 = vdwg.mxu0
    %434 = vmatprep.subr.bf16.mxu0 %v351
    %435 = vmatpush1.bf16.msra.mxu0 %v350
    %436 = vmatprep.subr.bf16.mxu0 %v346
    %437 = vmatpush1.bf16.msra.mxu0 %v345
    %438 = vmatprep.subr.bf16.mxu0 %v341
    %439 = vmatpush1.bf16.msra.mxu0 %v340
    %440 = vmatprep.subr.bf16.mxu0 %v336
    %441 = vmatpush1.bf16.msra.mxu0 %v335
    %442 = vmatprep.subr.bf16.mxu0 %v331
    %443 = vmatpush1.bf16.msra.mxu0 %v330
    %444 = vmatprep.subr.bf16.mxu0 %v326
    %445 = vmatpush1.bf16.msra.mxu0 %v325
    %446 = vmatprep.subr.bf16.mxu0 %v321
    %447 = vmatpush1.bf16.msra.mxu0 %v320
    %448 = vmatprep.subr.bf16.mxu0 %v316
    %449 = vmatpush1.bf16.msra.mxu0 %v315
    %450 = vmatprep.subr.bf16.mxu0 0
    %451 = vmatpush2.bf16.msra.mxu0 0
    %452 = vmatprep.subr.bf16.mxu0 0
    %453 = vmatpush2.bf16.msra.mxu0 0
    %454 = vmatprep.subr.bf16.mxu0 0
    %455 = vmatpush2.bf16.msra.mxu0 0
    %456 = vmatprep.subr.bf16.mxu0 0
    %457 = vmatpush2.bf16.msra.mxu0 0
    %458 = vmatprep.subr.bf16.mxu0 0
    %459 = vmatpush2.bf16.msra.mxu0 0
    %460 = vmatprep.subr.bf16.mxu0 0
    %461 = vmatpush2.bf16.msra.mxu0 0
    %462 = vmatprep.subr.bf16.mxu0 0
    %463 = vmatpush2.bf16.msra.mxu0 0
    %464 = vmatprep.subr.bf16.mxu0 0
    %465 = vmatpush2.bf16.msra.mxu0 0
    %466 = vmatprep.mubr.bf16.mxu0 0
    %467 = vmatmul.mubr.bf16.gmra.mxu0 %v109
    %v468 = vpop.f32.mrf.mxu0
    %v469 = vadd.f32 %v171, %v468
    %v470 = vpop.f32.mrf.mxu0
    %v471 = vadd.f32 %v175, %v470
    %v472 = vpop.f32.mrf.mxu0
    %v473 = vpop.f32.mrf.mxu0
    %474 = vdwg.mxu0
    %475 = vmatprep.subr.bf16.mxu0 0
    %476 = vmatpush1.bf16.msra.mxu0 %v352
    %477 = vmatprep.subr.bf16.mxu0 0
    %478 = vmatpush1.bf16.msra.mxu0 %v347
    %479 = vmatprep.subr.bf16.mxu0 0
    %480 = vmatpush1.bf16.msra.mxu0 %v342
    %481 = vmatprep.subr.bf16.mxu0 0
    %482 = vmatpush1.bf16.msra.mxu0 %v337
    %483 = vmatprep.subr.bf16.mxu0 0
    %484 = vmatpush1.bf16.msra.mxu0 %v332
    %485 = vmatprep.subr.bf16.mxu0 0
    %486 = vmatpush1.bf16.msra.mxu0 %v327
    %487 = vmatprep.subr.bf16.mxu0 0
    %488 = vmatpush1.bf16.msra.mxu0 %v322
    %489 = vmatprep.subr.bf16.mxu0 0
    %490 = vmatpush1.bf16.msra.mxu0 %v317
    %491 = vmatprep.subr.bf16.mxu0 0
    %492 = vmatpush2.bf16.msra.mxu0 0
    %493 = vmatprep.subr.bf16.mxu0 0
    %494 = vmatpush2.bf16.msra.mxu0 0
    %495 = vmatprep.subr.bf16.mxu0 0
    %496 = vmatpush2.bf16.msra.mxu0 0
    %497 = vmatprep.subr.bf16.mxu0 0
    %498 = vmatpush2.bf16.msra.mxu0 0
    %499 = vmatprep.subr.bf16.mxu0 0
    %500 = vmatpush2.bf16.msra.mxu0 0
    %501 = vmatprep.subr.bf16.mxu0 0
    %502 = vmatpush2.bf16.msra.mxu0 0
    %503 = vmatprep.subr.bf16.mxu0 0
    %504 = vmatpush2.bf16.msra.mxu0 0
    %505 = vmatprep.subr.bf16.mxu0 0
    %506 = vmatpush2.bf16.msra.mxu0 0
    %507 = vmatprep.mubr.bf16.mxu0 0
    %508 = vmatmul.mubr.bf16.gmra.mxu0 %v109
    %v509 = vpop.f32.mrf.mxu0
    %v510 = vadd.f32 %v179, %v509
    %v511 = vpop.f32.mrf.mxu0
    %v512 = vpop.f32.mrf.mxu0
    %v513 = vpop.f32.mrf.mxu0
    %514 = vdwg.mxu0
    %515 = vst [vmem:[#allocation2] sm:$0xff] %v428
    %516 = vst [vmem:[#allocation2 + $0x8] sm:$0xff] %v430
    %517 = vst [vmem:[#allocation2 + $0x10] sm:$0xff] %v469
    %518 = vst [vmem:[#allocation2 + $0x18] sm:$0xff] %v471
    %vm519 = vcmask 7168
    %520 = vst.msk [vmem:[#allocation2 + $0x20] sm:$0xff] %vm519, %v510
    // Predicated region
    $region22: #{tpu_custom_call.1} parent=1 // pred_check
      _
    $region23: #{tpu_custom_call.1} parent=1 // pred_check_branch
      %522 = sbr.rel (0) target = $region25
    $region24: #{tpu_custom_call.1} parent=1 // pred_region
      %s524 = ssub.s32 640, 640
      %525 = vsyncadd [#allocation3], %s524
      %s527 = sshll.u32 [#allocation2], 4
      %s528 = int_to_ptr.vmem [resolvable:$true] %s527
      %530 = dma.vmem_to_hbm [thread:$0]  %s528, 640, %s5, [#allocation3]
    $region25: #{tpu_custom_call.1} parent=1 // pred_fallthru
      _
    // Predicated region
    $region26: #{tpu_custom_call.1} parent=1 // pred_check
      _
    $region27: #{tpu_custom_call.1} parent=1 // pred_check_branch
      %532 = sbr.rel (0) target = $region29
    $region28: #{tpu_custom_call.1} parent=1 // pred_region
      %533 = dma.done [#allocation3], 640
    $region29: #{tpu_custom_call.1} parent=1 // pred_fallthru
      _
    %534 = vsyncpa [#allocation3], 1

</llo_original>
